<compile_context>
chip_gen: v6e
topology: v6e:2x2x1
jax: 0.10.0
libtpu: 0.0.40
codegen_flags: <defaults>
</compile_context>

<pallas_src>
import jax
import jax.numpy as jnp
from jax.experimental import pallas as pl
from jax.experimental.pallas import tpu as pltpu

# -------------------- configuration (small shapes consistent with the module) ------------
VOCAB_SIZE   = 50
NUM_CLASSES  = 4
NUM_KERNELS  = 8            # C: conv out-channels per kernel size
KERNEL_SIZES = (2, 3, 4)
EMB_SIZE     = 32
BATCH        = 2
SEQ_LEN      = 8
FEAT         = NUM_KERNELS * len(KERNEL_SIZES)      # 24
N_TOK        = BATCH * SEQ_LEN                       # 16 flattened token rows
MAX_K        = max(KERNEL_SIZES)                     # 4

LANES        = 128                                   # lane width of the packed slab / output
TOT          = MAX_K * FEAT                          # 96: tap-uniform conv-product columns
VOCAB_PAD    = ((VOCAB_SIZE + 7) // 8) * 8           # 56: sublane-aligned vocab rows

# Parameter-slab row layout (all regions 8-row aligned):
ROW_EMB   = 0                      # [VOCAB_PAD, LANES]  folded emb_table @ W_tap (row 0 zero)
ROW_MASK  = VOCAB_PAD              # [N_TOK, LANES]      conv validity mask (FEAT lanes used)
ROW_FCW   = ROW_MASK + N_TOK       # [FEAT, LANES]       fc weight, lane-padded
ROW_TAIL  = ROW_FCW + FEAT         # [8, LANES]          row 0: conv bias, row 1: fc bias
SLAB_ROWS = ROW_TAIL + 8           # 104


def textcnn_kernel(tok_ref, slab_ref, out_ref):
    """one-hot select of folded (table @ conv-weights) -> register tap-shift accumulate
    -> bias/ReLU/mask -> sublane max-pool -> single batched FC; no VMEM scratch."""
    # ---- embedding gather fused with conv weights: prod[r] = (table @ W_tap)[tok[r]] -----
    tok = tok_ref[...]                                                   # [N_TOK, 1] int32
    vocab_iota = jax.lax.broadcasted_iota(jnp.int32, (N_TOK, VOCAB_PAD), 1)
    onehot = (tok == vocab_iota).astype(jnp.float32)                     # exact row select
    prod = jnp.dot(onehot, slab_ref[ROW_EMB:ROW_EMB + VOCAB_PAD, :],
                   preferred_element_type=jnp.float32)                   # [N_TOK, LANES]

    # ---- tap-shift accumulation, fully in registers ---------------------------------------
    # tap i occupies lanes [i*FEAT, (i+1)*FEAT); groups with k <= i have zero columns there.
    conv = prod[:, 0:FEAT]
    for i in range(1, MAX_K):                                            # static unroll (3)
        tap = prod[:, i * FEAT:(i + 1) * FEAT]
        # circular sublane shift by -i; wrapped / batch-seam rows are zeroed by the mask below
        conv = conv + jnp.concatenate([tap[i:, :], tap[:i, :]], axis=0)

    # ---- bias + ReLU + validity mask (ReLU >= 0, so masked rows can never win the max) ----
    tail = slab_ref[ROW_TAIL:ROW_TAIL + 8, :]                            # aligned [8, LANES]
    bias = tail[0:1, 0:FEAT]                                             # conv bias row
    mask = slab_ref[ROW_MASK:ROW_MASK + N_TOK, :][:, 0:FEAT]             # [N_TOK, FEAT]
    x = jnp.maximum(conv + bias, 0.0) * mask                             # [N_TOK, FEAT]

    # ---- global max-pool per batch row: SEQ_LEN == sublane tile -> one sublane reduce -----
    feat = jnp.max(x.reshape(BATCH, SEQ_LEN, FEAT), axis=1)              # [BATCH, FEAT]

    # ---- single batched FC; weights lane-padded so the output store is lane-dense ---------
    fcw = slab_ref[ROW_FCW:ROW_FCW + FEAT, :]                            # [FEAT, LANES]
    out_ref[...] = jnp.dot(feat, fcw, preferred_element_type=jnp.float32) + tail[1:2, :]


# -------------------- one-time host-side parameter packing --------------------------------
def _valid_mask():
    rows = []
    for r in range(N_TOK):
        p = r % SEQ_LEN
        row = []
        for k in KERNEL_SIZES:
            row.extend([1.0 if p <= SEQ_LEN - k else 0.0] * NUM_KERNELS)
        rows.append(row)
    return jnp.asarray(rows, dtype=jnp.float32)                          # [N_TOK, FEAT]


def pack_params(params):
    """Called ONCE after init; never on the per-call path."""
    emb_table, conv_ws, conv_bs, fc_w, fc_b = params
    zero_block = jnp.zeros((EMB_SIZE, NUM_KERNELS), jnp.float32)
    blocks = []
    for i in range(MAX_K):                       # tap-uniform: every tap block is FEAT wide
        for g, k in enumerate(KERNEL_SIZES):
            blocks.append(conv_ws[g][i] if k > i else zero_block)
    w_tap = jnp.concatenate(blocks, axis=1)                              # [E, TOT]
    # Fold embedding table into conv weights (padding_idx=0: table row 0 is zero -> row 0 zero)
    emb_conv = jnp.dot(emb_table, w_tap, precision=jax.lax.Precision.HIGHEST)   # [V, TOT]
    emb_conv = jnp.pad(emb_conv, ((0, VOCAB_PAD - VOCAB_SIZE), (0, LANES - TOT)))
    mask = jnp.pad(_valid_mask(), ((0, 0), (0, LANES - FEAT)))
    fcw = jnp.pad(fc_w, ((0, 0), (0, LANES - NUM_CLASSES)))
    bias = jnp.pad(jnp.concatenate(conv_bs, axis=1), ((0, 0), (0, LANES - FEAT)))
    fcb = jnp.pad(fc_b, ((0, 0), (0, LANES - NUM_CLASSES)))
    tail = jnp.concatenate([bias, fcb, jnp.zeros((6, LANES), jnp.float32)], axis=0)
    slab = jnp.concatenate([emb_conv, mask, fcw, tail], axis=0)
    assert slab.shape == (SLAB_ROWS, LANES)
    return slab


@jax.jit
def textcnn_forward(tokens, slab):
    """Per-call path: tokens [B, L] int32 + pre-packed slab -> logits [B, NUM_CLASSES]."""
    tok_col = tokens.reshape(N_TOK, 1).astype(jnp.int32)
    flops = 2 * (N_TOK * VOCAB_PAD * LANES + BATCH * FEAT * LANES)
    bytes_accessed = 4 * (tok_col.size + SLAB_ROWS * LANES + BATCH * LANES)
    vmem = pl.BlockSpec(memory_space=pltpu.MemorySpace.VMEM)
    padded = pl.pallas_call(
        textcnn_kernel,
        out_shape=jax.ShapeDtypeStruct((BATCH, LANES), jnp.float32),
        in_specs=[vmem, vmem],
        out_specs=vmem,
        cost_estimate=pl.CostEstimate(flops=flops, transcendentals=0,
                                      bytes_accessed=bytes_accessed),
    )(tok_col, slab)
    return padded[:, :NUM_CLASSES]


# -------------------- parameters & pure-JAX reference -------------------------------------
def init_params(key):
    keys = jax.random.split(key, 3 + 2 * len(KERNEL_SIZES))
    emb_table = 0.1 * jax.random.normal(keys[0], (VOCAB_SIZE, EMB_SIZE), jnp.float32)
    emb_table = emb_table.at[0].set(0.0)                 # padding_idx=0 row is zero
    conv_ws, conv_bs = [], []
    for j, k in enumerate(KERNEL_SIZES):
        conv_ws.append(0.1 * jax.random.normal(
            keys[1 + 2 * j], (k, EMB_SIZE, NUM_KERNELS), jnp.float32))
        conv_bs.append(0.1 * jax.random.normal(
            keys[2 + 2 * j], (1, NUM_KERNELS), jnp.float32))
    fc_w = 0.1 * jax.random.normal(keys[-2], (FEAT, NUM_CLASSES), jnp.float32)
    fc_b = 0.1 * jax.random.normal(keys[-1], (1, NUM_CLASSES), jnp.float32)
    return emb_table, tuple(conv_ws), tuple(conv_bs), fc_w, fc_b


def ref_forward(tokens, params):
    """Pure-JAX reference mirroring the PyTorch forward exactly."""
    emb_table, conv_ws, conv_bs, fc_w, fc_b = params
    e = jnp.take(emb_table, tokens, axis=0)               # [B, L, E]
    feats = []
    for k, w, bc in zip(KERNEL_SIZES, conv_ws, conv_bs):
        lout = SEQ_LEN - k + 1
        c = sum(jnp.einsum('ble,ec->blc', e[:, i:i + lout, :], w[i]) for i in range(k))
        c = jax.nn.relu(c + bc[None])                      # [B, lout, C]
        feats.append(jnp.max(c, axis=1))                   # max_pool1d over full length
    f = jnp.concatenate(feats, axis=-1)                    # [B, FEAT]
    return f @ fc_w + fc_b


if __name__ == "__main__":
    key = jax.random.PRNGKey(0)
    pkey, tkey = jax.random.split(key)
    params = init_params(pkey)
    slab = jax.block_until_ready(pack_params(params))      # packed ONCE, off the call path
    tokens = jax.random.randint(tkey, (BATCH, SEQ_LEN), 0, VOCAB_SIZE, dtype=jnp.int32)

    out = textcnn_forward(tokens, slab)
    out = jax.block_until_ready(out)

    ref = ref_forward(tokens, params)
    assert out.shape == (BATCH, NUM_CLASSES)
    assert jnp.allclose(out, ref, atol=1e-4, rtol=1e-4), (out, ref)
    print("KERNEL_OK")
</pallas_src>

<mosaic_0001>
module attributes {stable_mosaic.version = 11 : i64} {
  func.func @textcnn_kernel(%arg0: memref<16x1xi32, #tpu.memory_space<vmem>>, %arg1: memref<104x128xf32, #tpu.memory_space<vmem>>, %arg2: memref<2x128xf32, #tpu.memory_space<vmem>>) attributes {dimension_semantics = [], scalar_prefetch = 0 : i64, scratch_operands = 0 : i64, tpu.core_type = #tpu.core_type<tc>} {
    %c0 = arith.constant 0 : index
    %c0_0 = arith.constant 0 : index
    %0 = vector.load %arg0[%c0, %c0_0] : memref<16x1xi32, #tpu.memory_space<vmem>>, vector<16x1xi32>
    %1 = tpu.iota {dimensions = array<i32: 1>} : vector<16x56xi32>
    %2 = vector.broadcast %0 : vector<16x1xi32> to vector<16x56xi32>
    %3 = arith.cmpi eq, %2, %1 : vector<16x56xi32>
    %4 = arith.extui %3 : vector<16x56xi1> to vector<16x56xi32>
    %5 = arith.sitofp %4 : vector<16x56xi32> to vector<16x56xf32>
    %c0_1 = arith.constant 0 : index
    %c0_2 = arith.constant 0 : index
    %6 = vector.load %arg1[%c0_1, %c0_2] : memref<104x128xf32, #tpu.memory_space<vmem>>, vector<56x128xf32>
    %cst = arith.constant dense<0.000000e+00> : vector<16x128xf32>
    %7 = tpu.matmul %5, %6, %cst {dimension_numbers = #tpu.dot_dimension_numbers<[1], [0], [0], [1], [0, 0, 1, 1], [], []>} : vector<16x56xf32>, vector<56x128xf32>, vector<16x128xf32> -> vector<16x128xf32>
    %8 = vector.extract_strided_slice %7 {offsets = [0, 0], sizes = [16, 24], strides = [1, 1]} : vector<16x128xf32> to vector<16x24xf32>
    %9 = vector.extract_strided_slice %7 {offsets = [0, 24], sizes = [16, 24], strides = [1, 1]} : vector<16x128xf32> to vector<16x24xf32>
    %10 = vector.extract_strided_slice %9 {offsets = [1, 0], sizes = [15, 24], strides = [1, 1]} : vector<16x24xf32> to vector<15x24xf32>
    %11 = vector.extract_strided_slice %9 {offsets = [0, 0], sizes = [1, 24], strides = [1, 1]} : vector<16x24xf32> to vector<1x24xf32>
    %12 = tpu.concatenate %10, %11 in 0 : vector<15x24xf32>, vector<1x24xf32> -> vector<16x24xf32>
    %13 = arith.addf %8, %12 : vector<16x24xf32>
    %14 = vector.extract_strided_slice %7 {offsets = [0, 48], sizes = [16, 24], strides = [1, 1]} : vector<16x128xf32> to vector<16x24xf32>
    %15 = vector.extract_strided_slice %14 {offsets = [2, 0], sizes = [14, 24], strides = [1, 1]} : vector<16x24xf32> to vector<14x24xf32>
    %16 = vector.extract_strided_slice %14 {offsets = [0, 0], sizes = [2, 24], strides = [1, 1]} : vector<16x24xf32> to vector<2x24xf32>
    %17 = tpu.concatenate %15, %16 in 0 : vector<14x24xf32>, vector<2x24xf32> -> vector<16x24xf32>
    %18 = arith.addf %13, %17 : vector<16x24xf32>
    %19 = vector.extract_strided_slice %7 {offsets = [0, 72], sizes = [16, 24], strides = [1, 1]} : vector<16x128xf32> to vector<16x24xf32>
    %20 = vector.extract_strided_slice %19 {offsets = [3, 0], sizes = [13, 24], strides = [1, 1]} : vector<16x24xf32> to vector<13x24xf32>
    %21 = vector.extract_strided_slice %19 {offsets = [0, 0], sizes = [3, 24], strides = [1, 1]} : vector<16x24xf32> to vector<3x24xf32>
    %22 = tpu.concatenate %20, %21 in 0 : vector<13x24xf32>, vector<3x24xf32> -> vector<16x24xf32>
    %23 = arith.addf %18, %22 : vector<16x24xf32>
    %c96 = arith.constant 96 : index
    %c0_3 = arith.constant 0 : index
    %24 = vector.load %arg1[%c96, %c0_3] : memref<104x128xf32, #tpu.memory_space<vmem>>, vector<8x128xf32>
    %25 = vector.extract_strided_slice %24 {offsets = [0, 0], sizes = [1, 24], strides = [1, 1]} : vector<8x128xf32> to vector<1x24xf32>
    %c56 = arith.constant 56 : index
    %c0_4 = arith.constant 0 : index
    %26 = vector.load %arg1[%c56, %c0_4] : memref<104x128xf32, #tpu.memory_space<vmem>>, vector<16x128xf32>
    %27 = vector.extract_strided_slice %26 {offsets = [0, 0], sizes = [16, 24], strides = [1, 1]} : vector<16x128xf32> to vector<16x24xf32>
    %28 = vector.broadcast %25 : vector<1x24xf32> to vector<16x24xf32>
    %29 = arith.addf %23, %28 : vector<16x24xf32>
    %cst_5 = arith.constant 0.000000e+00 : f32
    %30 = vector.broadcast %cst_5 : f32 to vector<16x24xf32>
    %31 = arith.maximumf %29, %30 : vector<16x24xf32>
    %32 = arith.mulf %31, %27 : vector<16x24xf32>
    %33 = vector.shape_cast %32 : vector<16x24xf32> to vector<2x8x24xf32>
    %cst_6 = arith.constant dense<0xFF800000> : vector<2x24xf32>
    %34 = vector.multi_reduction <maximumf>, %33, %cst_6 [1] : vector<2x8x24xf32> to vector<2x24xf32>
    %c72 = arith.constant 72 : index
    %c0_7 = arith.constant 0 : index
    %35 = vector.load %arg1[%c72, %c0_7] : memref<104x128xf32, #tpu.memory_space<vmem>>, vector<24x128xf32>
    %cst_8 = arith.constant dense<0.000000e+00> : vector<2x128xf32>
    %36 = tpu.matmul %34, %35, %cst_8 {dimension_numbers = #tpu.dot_dimension_numbers<[1], [0], [0], [1], [0, 0, 1, 1], [], []>} : vector<2x24xf32>, vector<24x128xf32>, vector<2x128xf32> -> vector<2x128xf32>
    %37 = vector.extract_strided_slice %24 {offsets = [1, 0], sizes = [1, 128], strides = [1, 1]} : vector<8x128xf32> to vector<1x128xf32>
    %38 = vector.broadcast %37 : vector<1x128xf32> to vector<2x128xf32>
    %39 = arith.addf %36, %38 : vector<2x128xf32>
    %c0_9 = arith.constant 0 : index
    %c0_10 = arith.constant 0 : index
    %40 = vector.load %arg2[%c0_9, %c0_10] : memref<2x128xf32, #tpu.memory_space<vmem>>, vector<2x128xf32>
    tpu.vector_store %arg2[%c0_9, %c0_10], %39 {strides = array<i32>} : memref<2x128xf32, #tpu.memory_space<vmem>>, vector<2x128xf32>,
    return
  }
}

</mosaic_0001>

<llo_original>
// kernel: textcnn_forward.1
$region0: #{textcnn_forward.1}
  #allocation0 [shape = 'u32[]', space=smem, size = 0x4, offset = 0x4, fixed_abs, tag = 'smem constant byte address 0x4 - core index']
  #allocation1 [shape = 'u32[144,128]{1,0:T(1,128)}', space=vmem, size = 0x12000, scoped, tag = 'internal scratch']
  %s0 = inlined_call_operand.vmem [shape: s32[16,1], index: 0, kind: input, shape index: {}]
  %s1 = inlined_call_operand.hbm [shape: f32[104,128], index: 1, kind: input, shape index: {}]
  %s2 = inlined_call_operand.hbm [shape: f32[2,128], index: 2, kind: output, shape index: {}]
  %s3 = sld [smem:[#allocation0]]
  $region22: #{textcnn_forward.1} parent=0
    _
  %s5 = ssub.s32 1, %s3
  %s6 = scalar_select 0, %s5, %s3
  $region1: #{textcnn_forward.1} parent=0
    #allocation2 [shape = 'u8[53248]{0}', space=vmem, size = 0xd000, scoped, tag = 'input window, operand 1, single buffered']
    #allocation3 [shape = 's32[1]{0}', space=sflag, size = 0x4, scoped, tag = 'scoped memory for textcnn_forward.1']
    #allocation4 [shape = 's32[1]{0}', space=sflag, size = 0x4, scoped, tag = 'scoped memory for textcnn_forward.1']
    #allocation5 [shape = 'u8[1024]{0}', space=vmem, size = 0x400, scoped, tag = 'output window, operand 0, single buffered']
    %7 = vsyncpa [#allocation3], 0
    %8 = vsyncpa [#allocation4], 0
    // Predicated region
    $region2: #{textcnn_forward.1} parent=1 // pred_check
      _
    $region3: #{textcnn_forward.1} parent=1 // pred_check_branch
      %10 = sbr.rel (0) target = $region5
    $region4: #{textcnn_forward.1} parent=1 // pred_region
      _
    $region5: #{textcnn_forward.1} parent=1 // pred_fallthru
      _
    // Predicated region
    $region6: #{textcnn_forward.1} parent=1 // pred_check
      _
    $region7: #{textcnn_forward.1} parent=1 // pred_check_branch
      %12 = sbr.rel (0) target = $region9
    $region8: #{textcnn_forward.1} parent=1 // pred_region
      %s14 = ssub.s32 1664, 1664
      %15 = vsyncadd [#allocation3], %s14
      %s16 = sshll.u32 [#allocation2], 4
      %s17 = int_to_ptr.vmem [resolvable:$true] %s16
      %22 = dma.hbm_to_vmem [thread:$0]  %s1, 1664, %s17, [#allocation3], 128, 128, 8
    $region9: #{textcnn_forward.1} parent=1 // pred_fallthru
      _
    // Predicated region
    $region10: #{textcnn_forward.1} parent=1 // pred_check
      _
    $region11: #{textcnn_forward.1} parent=1 // pred_check_branch
      %24 = sbr.rel (0) target = $region13
    $region12: #{textcnn_forward.1} parent=1 // pred_region
      %25 = dma.done [#allocation3], 1664
    $region13: #{textcnn_forward.1} parent=1 // pred_fallthru
      _
    %v26 = vld [vmem:[%s0] sm:$0xff]
    %v27 = vld [vmem:[%s0 + $0x8] sm:$0xff]
    %v28 = vlaneseq
    %v29 = vand.u32 %v28, 127
    %30 = vset.pattern.permute.xlu0 0
    %31 = vperm.xlu0 %30, %v26
    %v32 = vpop.permute.xlu0 %31
    %33 = vset.pattern.permute.xlu0 0
    %34 = vperm.xlu0 %33, %v27
    %v35 = vpop.permute.xlu0 %34
    %vm36 = vcmp.eq.s32.totalorder %v32, %v29
    %vm37 = vcmp.eq.s32.totalorder %v35, %v29
    %v38 = vsel %vm36, 1, 0
    %v39 = vsel %vm37, 1, 0
    %v40 = vcvt.s32.f32 %v38
    %v41 = vcvt.s32.f32 %v39
    %v42 = vld [vmem:[#allocation2] sm:$0xff]
    %v43 = vld [vmem:[#allocation2 + $0x8] sm:$0xff]
    %v44 = vld [vmem:[#allocation2 + $0x10] sm:$0xff]
    %v45 = vld [vmem:[#allocation2 + $0x18] sm:$0xff]
    %v46 = vld [vmem:[#allocation2 + $0x20] sm:$0xff]
    %v47 = vld [vmem:[#allocation2 + $0x28] sm:$0xff]
    %v48 = vld [vmem:[#allocation2 + $0x30] sm:$0xff]
    %vm49 = vcmask 457728
    %v51 = vsel %vm49, %v40, 0
    %v54 = vsel %vm49, %v41, 0
    %56 = vmatprep.subr.mxu0 0.0
    %57 = vmatpush1.msra.mxu0 0.0
    %58 = vmatprep.subr.mxu0 0.0
    %59 = vmatpush1.msra.mxu0 0.0
    %60 = vmatprep.subr.mxu0 0.0
    %61 = vmatpush1.msra.mxu0 0.0
    %62 = vmatprep.subr.mxu0 0.0
    %63 = vmatpush1.msra.mxu0 0.0
    %64 = vmatprep.subr.mxu0 0.0
    %65 = vmatpush1.msra.mxu0 0.0
    %66 = vmatprep.subr.mxu0 0.0
    %67 = vmatpush1.msra.mxu0 0.0
    %68 = vmatprep.subr.mxu0 0.0
    %69 = vmatpush1.msra.mxu0 0.0
    %70 = vmatprep.subr.mxu0 0.0
    %71 = vmatpush1.msra.mxu0 0.0
    %72 = vmatprep.subr.mxu0 0.0
    %73 = vmatpush1.msra.mxu0 0.0
    %74 = vmatprep.subr.mxu0 0.0
    %75 = vmatpush1.msra.mxu0 %v48
    %76 = vmatprep.subr.mxu0 0.0
    %77 = vmatpush1.msra.mxu0 %v47
    %78 = vmatprep.subr.mxu0 0.0
    %79 = vmatpush1.msra.mxu0 %v46
    %80 = vmatprep.subr.mxu0 0.0
    %81 = vmatpush1.msra.mxu0 %v45
    %82 = vmatprep.subr.mxu0 0.0
    %83 = vmatpush1.msra.mxu0 %v44
    %84 = vmatprep.subr.mxu0 0.0
    %85 = vmatpush1.msra.mxu0 %v43
    %86 = vmatprep.subr.mxu0 0.0
    %87 = vmatpush1.msra.mxu0 %v42
    %88 = vmatprep.subr.mxu0 0.0
    %89 = vmatpush2.msra.mxu0 0.0
    %90 = vmatprep.subr.mxu0 0.0
    %91 = vmatpush2.msra.mxu0 0.0
    %92 = vmatprep.subr.mxu0 0.0
    %93 = vmatpush2.msra.mxu0 0.0
    %94 = vmatprep.subr.mxu0 0.0
    %95 = vmatpush2.msra.mxu0 0.0
    %96 = vmatprep.subr.mxu0 0.0
    %97 = vmatpush2.msra.mxu0 0.0
    %98 = vmatprep.subr.mxu0 0.0
    %99 = vmatpush2.msra.mxu0 0.0
    %100 = vmatprep.subr.mxu0 0.0
    %101 = vmatpush2.msra.mxu0 0.0
    %102 = vmatprep.subr.mxu0 0.0
    %103 = vmatpush2.msra.mxu0 0.0
    %104 = vmatprep.subr.mxu0 0.0
    %105 = vmatpush2.msra.mxu0 0.0
    %106 = vmatprep.subr.mxu0 0.0
    %107 = vmatpush2.msra.mxu0 0.0
    %108 = vmatprep.subr.mxu0 0.0
    %109 = vmatpush2.msra.mxu0 0.0
    %110 = vmatprep.subr.mxu0 0.0
    %111 = vmatpush2.msra.mxu0 0.0
    %112 = vmatprep.subr.mxu0 0.0
    %113 = vmatpush2.msra.mxu0 0.0
    %114 = vmatprep.subr.mxu0 0.0
    %115 = vmatpush2.msra.mxu0 0.0
    %116 = vmatprep.subr.mxu0 0.0
    %117 = vmatpush2.msra.mxu0 0.0
    %118 = vmatprep.subr.mxu0 0.0
    %119 = vmatpush2.msra.mxu0 0.0
    %120 = vmatprep.mubr.f32.mxu0 0.0
    %121 = vmatmul.mubr.f32.gmra.mxu0 %v51
    %v122 = vpop.f32.mrf.mxu0
    %v123 = vadd.f32 0.0, %v122
    %v124 = vpop.f32.mrf.mxu0
    %125 = vmatprep.mubr.f32.mxu0 0.0
    %126 = vmatmul.mubr.f32.gmra.mxu0 %v54
    %v127 = vpop.f32.mrf.mxu0
    %v128 = vadd.f32 0.0, %v127
    %v129 = vpop.f32.mrf.mxu0
    %130 = vdwg.mxu0
    %vm133 = vcmask 1046528
    %v134 = vrot.slane %v123, 1
    %v135 = vrot.slane %v128, 1
    %v136 = vsel %vm133, %v134, %v135
    %v139 = vsel %vm133, %v135, %v134
    %141 = vrot.lane.b32.xlu0 %v136, 104
    %v142 = vpop.permute.xlu0 %141
    %143 = vrot.lane.b32.xlu0 %v139, 104
    %v144 = vpop.permute.xlu0 %143
    %v147 = vadd.f32 %v123, %v142
    %v148 = vadd.f32 %v128, %v144
    %vm149 = vcmask 1045504
    %v150 = vrot.slane %v123, 2
    %v151 = vrot.slane %v128, 2
    %v152 = vsel %vm149, %v150, %v151
    %v155 = vsel %vm149, %v151, %v150
    %157 = vrot.lane.b32.xlu0 %v152, 80
    %v158 = vpop.permute.xlu0 %157
    %159 = vrot.lane.b32.xlu0 %v155, 80
    %v160 = vpop.permute.xlu0 %159
    %v163 = vadd.f32 %v147, %v158
    %v164 = vadd.f32 %v148, %v160
    %vm165 = vcmask 1044480
    %v166 = vrot.slane %v123, 3
    %v167 = vrot.slane %v128, 3
    %v168 = vsel %vm165, %v166, %v167
    %v171 = vsel %vm165, %v167, %v166
    %173 = vrot.lane.b32.xlu0 %v168, 56
    %v174 = vpop.permute.xlu0 %173
    %175 = vrot.lane.b32.xlu0 %v171, 56
    %v176 = vpop.permute.xlu0 %175
    %v179 = vadd.f32 %v163, %v174
    %v180 = vadd.f32 %v164, %v176
    %v181 = vld [vmem:[#allocation2 + $0x60] sm:$0xff]
    %v182 = vld [vmem:[#allocation2 + $0x38] sm:$0xff]
    %v183 = vld [vmem:[#allocation2 + $0x40] sm:$0xff]
    %v184 = vlaneseq
    %v185 = vshrl.u32 %v184, 7
    %v186 = vsub.s32 0, %v185
    %v187 = vrot.slane %v181, %v186
    %v188 = vadd.f32 %v179, %v187
    %v189 = vadd.f32 %v180, %v187
    %v190 = vmax.f32 %v188, 0.0
    %v191 = vmax.f32 %v189, 0.0
    %v192 = vmul.f32 %v190, %v182
    %v193 = vmul.f32 %v191, %v183
    %vm194 = vcmask 195584
    %v195 = vsel %vm194, %v192, -inf
    %v196 = vrot.slane %v195, 4
    %v197 = vmax.f32 %v195, %v196
    %v198 = vrot.slane %v197, 2
    %v199 = vmax.f32 %v197, %v198
    %v200 = vrot.slane %v199, 1
    %v201 = vmax.f32 %v199, %v200
    %v202 = vsel %vm194, %v193, -inf
    %v203 = vrot.slane %v202, 4
    %v204 = vmax.f32 %v202, %v203
    %v205 = vrot.slane %v204, 2
    %v206 = vmax.f32 %v204, %v205
    %v207 = vrot.slane %v206, 1
    %v208 = vmax.f32 %v206, %v207
    %v209 = vld [vmem:[#allocation2 + $0x48] sm:$0xff]
    %v210 = vld [vmem:[#allocation2 + $0x50] sm:$0xff]
    %v211 = vld [vmem:[#allocation2 + $0x58] sm:$0xff]
    %v212 = vlaneseq
    %v213 = vshrl.u32 %v212, 7
    %v214 = vsub.s32 1, %v213
    %v215 = vrot.slane %v181, %v214
    %vm218 = vcmask 1041409
    %v219 = vsel %vm218, %v208, %v201
    %v220 = vsel %vm194, %v219, 0
    %222 = vmatprep.subr.mxu0 0.0
    %223 = vmatpush1.msra.mxu0 0.0
    %224 = vmatprep.subr.mxu0 0.0
    %225 = vmatpush1.msra.mxu0 0.0
    %226 = vmatprep.subr.mxu0 0.0
    %227 = vmatpush1.msra.mxu0 0.0
    %228 = vmatprep.subr.mxu0 0.0
    %229 = vmatpush1.msra.mxu0 0.0
    %230 = vmatprep.subr.mxu0 0.0
    %231 = vmatpush1.msra.mxu0 0.0
    %232 = vmatprep.subr.mxu0 0.0
    %233 = vmatpush1.msra.mxu0 0.0
    %234 = vmatprep.subr.mxu0 0.0
    %235 = vmatpush1.msra.mxu0 0.0
    %236 = vmatprep.subr.mxu0 0.0
    %237 = vmatpush1.msra.mxu0 0.0
    %238 = vmatprep.subr.mxu0 0.0
    %239 = vmatpush1.msra.mxu0 0.0
    %240 = vmatprep.subr.mxu0 0.0
    %241 = vmatpush1.msra.mxu0 0.0
    %242 = vmatprep.subr.mxu0 0.0
    %243 = vmatpush1.msra.mxu0 0.0
    %244 = vmatprep.subr.mxu0 0.0
    %245 = vmatpush1.msra.mxu0 0.0
    %246 = vmatprep.subr.mxu0 0.0
    %247 = vmatpush1.msra.mxu0 0.0
    %248 = vmatprep.subr.mxu0 0.0
    %249 = vmatpush1.msra.mxu0 %v211
    %250 = vmatprep.subr.mxu0 0.0
    %251 = vmatpush1.msra.mxu0 %v210
    %252 = vmatprep.subr.mxu0 0.0
    %253 = vmatpush1.msra.mxu0 %v209
    %254 = vmatprep.subr.mxu0 0.0
    %255 = vmatpush2.msra.mxu0 0.0
    %256 = vmatprep.subr.mxu0 0.0
    %257 = vmatpush2.msra.mxu0 0.0
    %258 = vmatprep.subr.mxu0 0.0
    %259 = vmatpush2.msra.mxu0 0.0
    %260 = vmatprep.subr.mxu0 0.0
    %261 = vmatpush2.msra.mxu0 0.0
    %262 = vmatprep.subr.mxu0 0.0
    %263 = vmatpush2.msra.mxu0 0.0
    %264 = vmatprep.subr.mxu0 0.0
    %265 = vmatpush2.msra.mxu0 0.0
    %266 = vmatprep.subr.mxu0 0.0
    %267 = vmatpush2.msra.mxu0 0.0
    %268 = vmatprep.subr.mxu0 0.0
    %269 = vmatpush2.msra.mxu0 0.0
    %270 = vmatprep.subr.mxu0 0.0
    %271 = vmatpush2.msra.mxu0 0.0
    %272 = vmatprep.subr.mxu0 0.0
    %273 = vmatpush2.msra.mxu0 0.0
    %274 = vmatprep.subr.mxu0 0.0
    %275 = vmatpush2.msra.mxu0 0.0
    %276 = vmatprep.subr.mxu0 0.0
    %277 = vmatpush2.msra.mxu0 0.0
    %278 = vmatprep.subr.mxu0 0.0
    %279 = vmatpush2.msra.mxu0 0.0
    %280 = vmatprep.subr.mxu0 0.0
    %281 = vmatpush2.msra.mxu0 0.0
    %282 = vmatprep.subr.mxu0 0.0
    %283 = vmatpush2.msra.mxu0 0.0
    %284 = vmatprep.subr.mxu0 0.0
    %285 = vmatpush2.msra.mxu0 0.0
    %286 = vmatprep.mubr.f32.mxu0 0.0
    %287 = vmatmul.mubr.f32.gmra.mxu0 %v220
    %v288 = vpop.f32.mrf.mxu0
    %v289 = vadd.f32 %v215, %v288
    %v290 = vpop.f32.mrf.mxu0
    %291 = vdwg.mxu0
    %292 = vst [vmem:[#allocation5] sm:$0x3] %v289
    // Predicated region
    $region14: #{textcnn_forward.1} parent=1 // pred_check
      _
    $region15: #{textcnn_forward.1} parent=1 // pred_check_branch
      %294 = sbr.rel (0) target = $region17
    $region16: #{textcnn_forward.1} parent=1 // pred_region
      %s296 = ssub.s32 32, 32
      %297 = vsyncadd [#allocation4], %s296
      %s299 = sshll.u32 [#allocation5], 4
      %s300 = int_to_ptr.vmem [resolvable:$true] %s299
      %302 = dma.vmem_to_hbm [thread:$0]  %s300, 32, %s2, [#allocation4]
    $region17: #{textcnn_forward.1} parent=1 // pred_fallthru
      _
    // Predicated region
    $region18: #{textcnn_forward.1} parent=1 // pred_check
      _
    $region19: #{textcnn_forward.1} parent=1 // pred_check_branch
      %304 = sbr.rel (0) target = $region21
    $region20: #{textcnn_forward.1} parent=1 // pred_region
      %305 = dma.done [#allocation4], 32
    $region21: #{textcnn_forward.1} parent=1 // pred_fallthru
      _
    %306 = vsyncpa [#allocation3], 1
    %307 = vsyncpa [#allocation4], 1

</llo_original>
